<compile_context>
chip_gen: v6e
topology: v6e:2x2x1
jax: 0.10.0
libtpu: 0.0.40
codegen_flags: <defaults>
</compile_context>

<pallas_src>
import functools

import jax
import jax.numpy as jnp
from jax.experimental import pallas as pl
from jax.experimental.pallas import tpu as pltpu

BN_EPS = 1e-5


# ----------------------------- fused Pallas kernel ----------------------------------

def _fused_residual_block_kernel(lhs1_ref, m1_ref, m2_ref, xres_ref, bnp_ref, pmat_ref,
                                 out_ref, ypad_ref, *, N, H, W, CO):
  """Single-step kernel.  Lane layout everywhere is lane = w*CO + co; M = N*H rows."""
  WCO = W * CO

  def bn_scale_shift(z, g_row, b_row):
    # Row reduction on the XLU (free slot); lane-group <-> channel reduce+broadcast is
    # one lane-dense matmul against a block-identity matrix (1/M already folded in).
    s = jnp.sum(z, axis=0, keepdims=True)            # (1, W*CO)
    ss = jnp.sum(z * z, axis=0, keepdims=True)
    pmat = pmat_ref[...]                             # (W*CO, W*CO)
    mean_l = jnp.dot(s, pmat, preferred_element_type=jnp.float32)
    ex2_l = jnp.dot(ss, pmat, preferred_element_type=jnp.float32)
    # TODO(synk): E[x^2]-E[x]^2 in f32 is fine at N*H*W=512; switch to a shifted /
    # two-pass variance if scaled to production sizes.
    var_l = ex2_l - mean_l * mean_l
    rstd_l = jax.lax.rsqrt(var_l + BN_EPS)
    scale = rstd_l * g_row
    shift = b_row - mean_l * scale
    return scale, shift

  # ---- conv1: single (N*H, 3*W*C) @ (3*W*C, W*CO) matmul over the whole batch -------
  z1 = jnp.dot(lhs1_ref[...], m1_ref[...], preferred_element_type=jnp.float32)

  # ---- BN1 (training-mode batch stats) + swish ---------------------------------------
  scale1, shift1 = bn_scale_shift(z1, bnp_ref[0:1, :], bnp_ref[1:2, :])
  zn = z1 * scale1 + shift1
  y = zn * pl.reciprocal(1.0 + jnp.exp(-zn), approx=True)     # swish; recip on the EUP

  # ---- conv2: build the row-shifted K = 3*W*CO LHS via a zero-halo scratch -----------
  zero_row = jnp.zeros((N, 1, WCO), jnp.float32)
  ypad_ref[:, 0:1, :] = zero_row                    # zero only the halo rows (once)
  ypad_ref[:, H + 1:H + 2, :] = zero_row
  ypad_ref[:, 1:H + 1, :] = y.reshape(N, H, WCO)
  yb = ypad_ref[...]                                # (N, H+2, W*CO) f32
  lhs2 = jnp.concatenate([yb[:, dy:dy + H, :] for dy in range(3)], axis=-1)
  lhs2 = lhs2.reshape(N * H, 3 * WCO).astype(jnp.bfloat16)
  z2 = jnp.dot(lhs2, m2_ref[...], preferred_element_type=jnp.float32)

  # ---- BN2 + residual add + store -----------------------------------------------------
  scale2, shift2 = bn_scale_shift(z2, bnp_ref[2:3, :], bnp_ref[3:4, :])
  out_ref[...] = z2 * scale2 + shift2 + xres_ref[...]


# ----------------------------- wrapper (layout plumbing) ----------------------------

def _banded_conv_weights(w_oihw, W):
  """Torch (Cout, Cin, 3, 3) conv weight -> fused banded matmul matrix (3*W*Cin, W*Cout).

  K-block dy holds the dx-banded matrix for kernel row dy:
    M[dy*W*Cin + wi*Cin + ci, wo*Cout + co] = w[co, ci, dy, dx]  with  wi = wo + dx - 1
  (taps outside [0, W) hit zero padding and are dropped), so a padded 3x3 conv becomes
    z = concat_dy(xrowpad[dy:dy+H]) @ M.
  """
  CO, CI, KH, KW = w_oihw.shape
  assert KH == 3 and KW == 3, "module uses k=3, padding=1"
  w_hwio = jnp.transpose(w_oihw, (2, 3, 1, 0)).astype(jnp.float32)   # (3, 3, CI, CO)
  mats = []
  for dy in range(KH):
    m = jnp.zeros((W, CI, W, CO), jnp.float32)
    for dx in range(KW):
      shift = jnp.eye(W, W, k=1 - dx, dtype=jnp.float32)  # [wi, wo]=1 iff wi==wo+dx-1
      m = m + jnp.einsum('pq,io->piqo', shift, w_hwio[dy, dx])
    mats.append(m.reshape(W * CI, W * CO))
  return jnp.concatenate(mats, axis=0)                      # (3*W*CI, W*CO)


def residual_block_forward(x_nchw, params):
  N, C, H, W = x_nchw.shape
  CO = params["w1"].shape[0]
  assert CO == C, "residual add requires n (out channels) == in_channels"
  Hp = H + 2
  WC, WCO = W * C, W * CO

  # NCHW -> NHWC, fuse (W, C) into the lane dimension.
  x_nhwc = jnp.transpose(x_nchw, (0, 2, 3, 1)).astype(jnp.float32)   # (N, H, W, C)
  x_fused = x_nhwc.reshape(N, H, WC)
  xres = x_fused.reshape(N * H, WC)                                  # f32 residual

  # conv1 LHS: pad rows, lane-concatenate the three row-shifted views, pre-cast bf16.
  x_hpad = jnp.pad(x_fused, ((0, 0), (1, 1), (0, 0)))
  lhs1 = jnp.concatenate([x_hpad[:, dy:dy + H, :] for dy in range(3)], axis=-1)
  lhs1 = lhs1.reshape(N * H, 3 * WC).astype(jnp.bfloat16)            # (N*H, 3*W*C)

  # Fused banded conv weights as bf16 MXU operands.  Conv biases are dropped: they
  # cancel exactly under training-mode BatchNorm (mean subtraction removes them).
  m1 = _banded_conv_weights(params["w1"], W).astype(jnp.bfloat16)    # (3*W*C,  W*CO)
  m2 = _banded_conv_weights(params["w2"], W).astype(jnp.bfloat16)    # (3*W*CO, W*CO)

  # BN affine params, pre-tiled to per-lane form (lane = w*CO + co).
  bnp = jnp.stack([jnp.tile(params["g1"].astype(jnp.float32), W),
                   jnp.tile(params["bt1"].astype(jnp.float32), W),
                   jnp.tile(params["g2"].astype(jnp.float32), W),
                   jnp.tile(params["bt2"].astype(jnp.float32), W)])  # (4, W*CO)

  # Block-identity matrix (tiled eye(CO)) with 1/M folded in: one matmul against it
  # reduces per-lane sums over the W lane-groups AND broadcasts the per-channel result
  # back to per-lane form.
  pmat = jnp.tile(jnp.eye(CO, dtype=jnp.float32), (W, W)) / float(N * H * W)

  kernel = functools.partial(_fused_residual_block_kernel, N=N, H=H, W=W, CO=CO)

  flops = 2 * (N * H) * (3 * WC + 3 * WCO) * WCO + 4 * 2 * WCO * WCO
  bytes_accessed = (lhs1.size * 2 + m1.size * 2 + m2.size * 2 + xres.size * 4
                    + bnp.size * 4 + pmat.size * 4 + N * H * WCO * 4)

  out_fused = pl.pallas_call(
      kernel,
      out_shape=jax.ShapeDtypeStruct((N * H, WCO), jnp.float32),
      in_specs=[pl.BlockSpec(memory_space=pltpu.MemorySpace.VMEM)] * 6,
      out_specs=pl.BlockSpec(memory_space=pltpu.MemorySpace.VMEM),
      scratch_shapes=[pltpu.VMEM((N, Hp, WCO), jnp.float32)],   # zero-halo conv2 rows
      compiler_params=pltpu.CompilerParams(vmem_limit_bytes=32 * 1024 * 1024),
      cost_estimate=pl.CostEstimate(flops=int(flops),
                                    transcendentals=int(2 * N * H * WCO),
                                    bytes_accessed=int(bytes_accessed)),
  )(lhs1, m1, m2, xres, bnp, pmat)

  # TODO(synk): at production N/C, tile N*H over a grid, stream the conv2 LHS, and use
  # per-core BN partial sums to engage v7x's second TensorCore; at the demo shape the
  # whole problem fits in VMEM so a single step is fastest.
  return jnp.transpose(out_fused.reshape(N, H, W, CO), (0, 3, 1, 2))


# ----------------------------- pure-JAX reference -----------------------------------

def _ref_forward(x, params, conv_dtype=jnp.float32):
  """PyTorch training-mode semantics (batch stats, biased variance, eps=1e-5)."""
  def conv(xx, w, b):
    y = jax.lax.conv_general_dilated(
        xx.astype(conv_dtype), w.astype(conv_dtype), (1, 1), ((1, 1), (1, 1)),
        dimension_numbers=("NCHW", "OIHW", "NCHW"),
        preferred_element_type=jnp.float32)
    return y + b[None, :, None, None]

  def bn(xx, g, bt):
    mean = jnp.mean(xx, axis=(0, 2, 3), keepdims=True)
    var = jnp.mean((xx - mean) ** 2, axis=(0, 2, 3), keepdims=True)
    return (xx - mean) * jax.lax.rsqrt(var + BN_EPS) * g[None, :, None, None] \
        + bt[None, :, None, None]

  y = bn(conv(x, params["w1"], params["b1"]), params["g1"], params["bt1"])
  y = y * jax.nn.sigmoid(y)
  return bn(conv(y, params["w2"], params["b2"]), params["g2"], params["bt2"]) + x


# ----------------------------- main --------------------------------------------------

if __name__ == "__main__":
  key = jax.random.PRNGKey(0)
  N, C, H, W = 2, 8, 16, 16      # in_channels = n = 8, k = 3, s = 1  (W*C = 128 lanes)
  k = 3
  n_out = C                      # residual add requires n == in_channels

  keys = jax.random.split(key, 9)
  x = jax.random.normal(keys[0], (N, C, H, W), dtype=jnp.float32)
  params = {
      "w1": 0.05 * jax.random.normal(keys[1], (n_out, C, k, k), dtype=jnp.float32),
      "b1": 0.05 * jax.random.normal(keys[2], (n_out,), dtype=jnp.float32),
      "g1": 1.0 + 0.1 * jax.random.normal(keys[3], (n_out,), dtype=jnp.float32),
      "bt1": 0.1 * jax.random.normal(keys[4], (n_out,), dtype=jnp.float32),
      "w2": 0.05 * jax.random.normal(keys[5], (n_out, n_out, k, k), dtype=jnp.float32),
      "b2": 0.05 * jax.random.normal(keys[6], (n_out,), dtype=jnp.float32),
      "g2": 1.0 + 0.1 * jax.random.normal(keys[7], (n_out,), dtype=jnp.float32),
      "bt2": 0.1 * jax.random.normal(keys[8], (n_out,), dtype=jnp.float32),
  }

  out = jax.block_until_ready(jax.jit(residual_block_forward)(x, params))

  # The kernel feeds the MXU bf16 operands (and uses an EUP approx reciprocal in the
  # swish): compare tightly against a matched-precision reference and loosely against
  # the full-f32 reference.
  ref_bf16 = jax.block_until_ready(_ref_forward(x, params, conv_dtype=jnp.bfloat16))
  ref_f32 = jax.block_until_ready(_ref_forward(x, params, conv_dtype=jnp.float32))

  assert out.shape == (N, C, H, W), out.shape
  err_bf16 = float(jnp.max(jnp.abs(out - ref_bf16)))
  err_f32 = float(jnp.max(jnp.abs(out - ref_f32)))
  assert err_bf16 < 3e-2, ("mismatch vs matched-precision reference", err_bf16)
  assert err_f32 < 1.5e-1, ("mismatch vs f32 reference", err_f32)
  print("KERNEL_OK")
</pallas_src>

<mosaic_0001>
module attributes {stable_mosaic.version = 11 : i64} {
  func.func @_fused_residual_block_kernel(%arg0: memref<32x384xbf16, #tpu.memory_space<vmem>>, %arg1: memref<384x128xbf16, #tpu.memory_space<vmem>>, %arg2: memref<384x128xbf16, #tpu.memory_space<vmem>>, %arg3: memref<32x128xf32, #tpu.memory_space<vmem>>, %arg4: memref<4x128xf32, #tpu.memory_space<vmem>>, %arg5: memref<128x128xf32, #tpu.memory_space<vmem>>, %arg6: memref<32x128xf32, #tpu.memory_space<vmem>>, %arg7: memref<2x18x128xf32, #tpu.memory_space<vmem>>) attributes {dimension_semantics = [], scalar_prefetch = 0 : i64, scratch_operands = 1 : i64, tpu.core_type = #tpu.core_type<tc>} {
    %c0 = arith.constant 0 : index
    %c0_0 = arith.constant 0 : index
    %0 = vector.load %arg0[%c0, %c0_0] : memref<32x384xbf16, #tpu.memory_space<vmem>>, vector<32x384xbf16>
    %c0_1 = arith.constant 0 : index
    %c0_2 = arith.constant 0 : index
    %1 = vector.load %arg1[%c0_1, %c0_2] : memref<384x128xbf16, #tpu.memory_space<vmem>>, vector<384x128xbf16>
    %cst = arith.constant dense<0.000000e+00> : vector<32x128xf32>
    %2 = tpu.matmul %0, %1, %cst {dimension_numbers = #tpu.dot_dimension_numbers<[1], [0], [0], [1], [0, 0, 1, 1], [], []>} : vector<32x384xbf16>, vector<384x128xbf16>, vector<32x128xf32> -> vector<32x128xf32>
    %c0_3 = arith.constant 0 : index
    %c0_4 = arith.constant 0 : index
    %3 = vector.load %arg4[%c0_3, %c0_4] : memref<4x128xf32, #tpu.memory_space<vmem>>, vector<1x128xf32>
    %c1 = arith.constant 1 : index
    %c0_5 = arith.constant 0 : index
    %4 = vector.load %arg4[%c1, %c0_5] : memref<4x128xf32, #tpu.memory_space<vmem>>, vector<1x128xf32>
    %cst_6 = arith.constant dense<0.000000e+00> : vector<128xf32>
    %5 = vector.multi_reduction <add>, %2, %cst_6 [0] : vector<32x128xf32> to vector<128xf32>
    %6 = vector.shape_cast %5 : vector<128xf32> to vector<1x128xf32>
    %7 = arith.mulf %2, %2 : vector<32x128xf32>
    %cst_7 = arith.constant dense<0.000000e+00> : vector<128xf32>
    %8 = vector.multi_reduction <add>, %7, %cst_7 [0] : vector<32x128xf32> to vector<128xf32>
    %9 = vector.shape_cast %8 : vector<128xf32> to vector<1x128xf32>
    %c0_8 = arith.constant 0 : index
    %c0_9 = arith.constant 0 : index
    %10 = vector.load %arg5[%c0_8, %c0_9] : memref<128x128xf32, #tpu.memory_space<vmem>>, vector<128x128xf32>
    %cst_10 = arith.constant dense<0.000000e+00> : vector<1x128xf32>
    %11 = tpu.matmul %6, %10, %cst_10 {dimension_numbers = #tpu.dot_dimension_numbers<[1], [0], [0], [1], [0, 0, 1, 1], [], []>} : vector<1x128xf32>, vector<128x128xf32>, vector<1x128xf32> -> vector<1x128xf32>
    %cst_11 = arith.constant dense<0.000000e+00> : vector<1x128xf32>
    %12 = tpu.matmul %9, %10, %cst_11 {dimension_numbers = #tpu.dot_dimension_numbers<[1], [0], [0], [1], [0, 0, 1, 1], [], []>} : vector<1x128xf32>, vector<128x128xf32>, vector<1x128xf32> -> vector<1x128xf32>
    %13 = arith.mulf %11, %11 : vector<1x128xf32>
    %14 = arith.subf %12, %13 : vector<1x128xf32>
    %cst_12 = arith.constant 9.99999974E-6 : f32
    %15 = vector.broadcast %cst_12 : f32 to vector<1x128xf32>
    %16 = arith.addf %14, %15 : vector<1x128xf32>
    %17 = math.rsqrt %16 : vector<1x128xf32>
    %18 = arith.mulf %17, %3 : vector<1x128xf32>
    %19 = arith.mulf %11, %18 : vector<1x128xf32>
    %20 = arith.subf %4, %19 : vector<1x128xf32>
    %21 = vector.broadcast %18 : vector<1x128xf32> to vector<32x128xf32>
    %22 = arith.mulf %2, %21 : vector<32x128xf32>
    %23 = vector.broadcast %20 : vector<1x128xf32> to vector<32x128xf32>
    %24 = arith.addf %22, %23 : vector<32x128xf32>
    %cst_13 = arith.constant 0.000000e+00 : f32
    %25 = vector.broadcast %cst_13 : f32 to vector<32x128xf32>
    %26 = arith.subf %25, %24 : vector<32x128xf32>
    %27 = math.exp %26 : vector<32x128xf32>
    %cst_14 = arith.constant 1.000000e+00 : f32
    %28 = vector.broadcast %cst_14 : f32 to vector<32x128xf32>
    %29 = arith.addf %28, %27 : vector<32x128xf32>
    %30 = tpu.reciprocal %29 {approx = true} : vector<32x128xf32> -> vector<32x128xf32>
    %31 = arith.mulf %24, %30 : vector<32x128xf32>
    %cst_15 = arith.constant 0.000000e+00 : f32
    %32 = vector.broadcast %cst_15 : f32 to vector<2x1x128xf32>
    %c0_16 = arith.constant 0 : index
    %c0_17 = arith.constant 0 : index
    %c0_18 = arith.constant 0 : index
    %33 = vector.load %arg7[%c0_16, %c0_17, %c0_18] : memref<2x18x128xf32, #tpu.memory_space<vmem>>, vector<2x1x128xf32>
    tpu.vector_store %arg7[%c0_16, %c0_17, %c0_18], %32 {strides = array<i32>} : memref<2x18x128xf32, #tpu.memory_space<vmem>>, vector<2x1x128xf32>,
    %c0_19 = arith.constant 0 : index
    %c17 = arith.constant 17 : index
    %c0_20 = arith.constant 0 : index
    %34 = vector.load %arg7[%c0_19, %c17, %c0_20] : memref<2x18x128xf32, #tpu.memory_space<vmem>>, vector<2x1x128xf32>
    tpu.vector_store %arg7[%c0_19, %c17, %c0_20], %32 {strides = array<i32>} : memref<2x18x128xf32, #tpu.memory_space<vmem>>, vector<2x1x128xf32>,
    %35 = vector.shape_cast %31 : vector<32x128xf32> to vector<2x16x128xf32>
    %c0_21 = arith.constant 0 : index
    %c1_22 = arith.constant 1 : index
    %c0_23 = arith.constant 0 : index
    %36 = vector.load %arg7[%c0_21, %c1_22, %c0_23] : memref<2x18x128xf32, #tpu.memory_space<vmem>>, vector<2x16x128xf32>
    tpu.vector_store %arg7[%c0_21, %c1_22, %c0_23], %35 {strides = array<i32>} : memref<2x18x128xf32, #tpu.memory_space<vmem>>, vector<2x16x128xf32>,
    %c0_24 = arith.constant 0 : index
    %c0_25 = arith.constant 0 : index
    %c0_26 = arith.constant 0 : index
    %37 = vector.load %arg7[%c0_24, %c0_25, %c0_26] : memref<2x18x128xf32, #tpu.memory_space<vmem>>, vector<2x18x128xf32>
    %38 = vector.extract_strided_slice %37 {offsets = [0, 0, 0], sizes = [2, 16, 128], strides = [1, 1, 1]} : vector<2x18x128xf32> to vector<2x16x128xf32>
    %39 = vector.extract_strided_slice %37 {offsets = [0, 1, 0], sizes = [2, 16, 128], strides = [1, 1, 1]} : vector<2x18x128xf32> to vector<2x16x128xf32>
    %40 = vector.extract_strided_slice %37 {offsets = [0, 2, 0], sizes = [2, 16, 128], strides = [1, 1, 1]} : vector<2x18x128xf32> to vector<2x16x128xf32>
    %41 = tpu.concatenate %38, %39, %40 in 2 : vector<2x16x128xf32>, vector<2x16x128xf32>, vector<2x16x128xf32> -> vector<2x16x384xf32>
    %42 = vector.shape_cast %41 : vector<2x16x384xf32> to vector<32x384xf32>
    %43 = arith.truncf %42 : vector<32x384xf32> to vector<32x384xbf16>
    %c0_27 = arith.constant 0 : index
    %c0_28 = arith.constant 0 : index
    %44 = vector.load %arg2[%c0_27, %c0_28] : memref<384x128xbf16, #tpu.memory_space<vmem>>, vector<384x128xbf16>
    %cst_29 = arith.constant dense<0.000000e+00> : vector<32x128xf32>
    %45 = tpu.matmul %43, %44, %cst_29 {dimension_numbers = #tpu.dot_dimension_numbers<[1], [0], [0], [1], [0, 0, 1, 1], [], []>} : vector<32x384xbf16>, vector<384x128xbf16>, vector<32x128xf32> -> vector<32x128xf32>
    %c2 = arith.constant 2 : index
    %c0_30 = arith.constant 0 : index
    %46 = vector.load %arg4[%c2, %c0_30] : memref<4x128xf32, #tpu.memory_space<vmem>>, vector<1x128xf32>
    %c3 = arith.constant 3 : index
    %c0_31 = arith.constant 0 : index
    %47 = vector.load %arg4[%c3, %c0_31] : memref<4x128xf32, #tpu.memory_space<vmem>>, vector<1x128xf32>
    %cst_32 = arith.constant dense<0.000000e+00> : vector<128xf32>
    %48 = vector.multi_reduction <add>, %45, %cst_32 [0] : vector<32x128xf32> to vector<128xf32>
    %49 = vector.shape_cast %48 : vector<128xf32> to vector<1x128xf32>
    %50 = arith.mulf %45, %45 : vector<32x128xf32>
    %cst_33 = arith.constant dense<0.000000e+00> : vector<128xf32>
    %51 = vector.multi_reduction <add>, %50, %cst_33 [0] : vector<32x128xf32> to vector<128xf32>
    %52 = vector.shape_cast %51 : vector<128xf32> to vector<1x128xf32>
    %c0_34 = arith.constant 0 : index
    %c0_35 = arith.constant 0 : index
    %53 = vector.load %arg5[%c0_34, %c0_35] : memref<128x128xf32, #tpu.memory_space<vmem>>, vector<128x128xf32>
    %cst_36 = arith.constant dense<0.000000e+00> : vector<1x128xf32>
    %54 = tpu.matmul %49, %53, %cst_36 {dimension_numbers = #tpu.dot_dimension_numbers<[1], [0], [0], [1], [0, 0, 1, 1], [], []>} : vector<1x128xf32>, vector<128x128xf32>, vector<1x128xf32> -> vector<1x128xf32>
    %cst_37 = arith.constant dense<0.000000e+00> : vector<1x128xf32>
    %55 = tpu.matmul %52, %53, %cst_37 {dimension_numbers = #tpu.dot_dimension_numbers<[1], [0], [0], [1], [0, 0, 1, 1], [], []>} : vector<1x128xf32>, vector<128x128xf32>, vector<1x128xf32> -> vector<1x128xf32>
    %56 = arith.mulf %54, %54 : vector<1x128xf32>
    %57 = arith.subf %55, %56 : vector<1x128xf32>
    %cst_38 = arith.constant 9.99999974E-6 : f32
    %58 = vector.broadcast %cst_38 : f32 to vector<1x128xf32>
    %59 = arith.addf %57, %58 : vector<1x128xf32>
    %60 = math.rsqrt %59 : vector<1x128xf32>
    %61 = arith.mulf %60, %46 : vector<1x128xf32>
    %62 = arith.mulf %54, %61 : vector<1x128xf32>
    %63 = arith.subf %47, %62 : vector<1x128xf32>
    %64 = vector.broadcast %61 : vector<1x128xf32> to vector<32x128xf32>
    %65 = arith.mulf %45, %64 : vector<32x128xf32>
    %66 = vector.broadcast %63 : vector<1x128xf32> to vector<32x128xf32>
    %67 = arith.addf %65, %66 : vector<32x128xf32>
    %c0_39 = arith.constant 0 : index
    %c0_40 = arith.constant 0 : index
    %68 = vector.load %arg3[%c0_39, %c0_40] : memref<32x128xf32, #tpu.memory_space<vmem>>, vector<32x128xf32>
    %69 = arith.addf %67, %68 : vector<32x128xf32>
    %c0_41 = arith.constant 0 : index
    %c0_42 = arith.constant 0 : index
    %70 = vector.load %arg6[%c0_41, %c0_42] : memref<32x128xf32, #tpu.memory_space<vmem>>, vector<32x128xf32>
    tpu.vector_store %arg6[%c0_41, %c0_42], %69 {strides = array<i32>} : memref<32x128xf32, #tpu.memory_space<vmem>>, vector<32x128xf32>,
    return
  }
}

</mosaic_0001>

<llo_original>
// kernel: tile.28
$region0: #{tile.28}
  #allocation0 [shape = 's32[1]{0}', space=sflag, size = 0x4, scoped, tag = 'scoped memory for tile.28']
  %s0 = inlined_call_operand.vmem [shape: f32[8], index: 0, kind: input, shape index: {}]
  %s1 = inlined_call_operand.vmem [shape: f32[16,8], index: 1, kind: output, shape index: {}]
  // Predicated region
  $region2: #{tile.28} parent=0 // pred_check
    _
  $region3: #{tile.28} parent=0 // pred_check_branch
    %3 = sbr.rel (0) target = $region5
  $region4: #{tile.28} parent=0 // pred_region
    _
  $region5: #{tile.28} parent=0 // pred_fallthru
    _
  %v4 = vld [vmem:[%s0] ss:$0 sm:$0xff]
  %5 = vst [vmem:[%s1] sm:$0xff] %v4
  %s6 = scalar_lea.vmem %s1, 8
  %7 = vst [vmem:[%s6] sm:$0xff] %v4

// kernel: tile.41
$region0: #{tile.41}
  %s0 = inlined_call_operand.vmem [shape: f32[16,8], index: 0, kind: input, shape index: {}]
  %s1 = inlined_call_operand.vmem [shape: f32[1,128], index: 1, kind: output, shape index: {}]
  $region1: #{tile.41} parent=0
    #allocation0 [shape = 'u8[4096]{0}', space=vmem, size = 0x1000, scoped, tag = 'scoped mem for output reshape']
    %v2 = vld [vmem:[%s0] sm:$0x1]
    %vm3 = vcmask 64512
    %4 = vst.msk [vmem:[#allocation0] sm:$0x1] %vm3, %v2
    %s5 = scalar_lea.vmem %s0, 15
    %v6 = vld [vmem:[%s5] sm:$0x1]
    %7 = vrot.lane.b32.xlu0 %v6, 120
    %v8 = vpop.permute.xlu0 %7
    %vm9 = vcmask 1048512
    %10 = vst.msk [vmem:[#allocation0] sm:$0x1] %vm9, %v8
    %s11 = scalar_lea.vmem %s0, 14
    %v12 = vld [vmem:[%s11] sm:$0x1]
    %13 = vrot.lane.b32.xlu0 %v12, 112
    %v14 = vpop.permute.xlu0 %13
    %vm15 = vcmask 982912
    %16 = vst.msk [vmem:[#allocation0] sm:$0x1] %vm15, %v14
    %s17 = scalar_lea.vmem %s0, 13
    %v18 = vld [vmem:[%s17] sm:$0x1]
    %19 = vrot.lane.b32.xlu0 %v18, 104
    %v20 = vpop.permute.xlu0 %19
    %vm21 = vcmask 917312
    %22 = vst.msk [vmem:[#allocation0] sm:$0x1] %vm21, %v20
    %s23 = scalar_lea.vmem %s0, 12
    %v24 = vld [vmem:[%s23] sm:$0x1]
    %25 = vrot.lane.b32.xlu0 %v24, 96
    %v26 = vpop.permute.xlu0 %25
    %vm27 = vcmask 851712
    %28 = vst.msk [vmem:[#allocation0] sm:$0x1] %vm27, %v26
    %s29 = scalar_lea.vmem %s0, 11
    %v30 = vld [vmem:[%s29] sm:$0x1]
    %31 = vrot.lane.b32.xlu0 %v30, 88
    %v32 = vpop.permute.xlu0 %31
    %vm33 = vcmask 786112
    %34 = vst.msk [vmem:[#allocation0] sm:$0x1] %vm33, %v32
    %s35 = scalar_lea.vmem %s0, 10
    %v36 = vld [vmem:[%s35] sm:$0x1]
    %37 = vrot.lane.b32.xlu0 %v36, 80
    %v38 = vpop.permute.xlu0 %37
    %vm39 = vcmask 720512
    %40 = vst.msk [vmem:[#allocation0] sm:$0x1] %vm39, %v38
    %s41 = scalar_lea.vmem %s0, 9
    %v42 = vld [vmem:[%s41] sm:$0x1]
    %43 = vrot.lane.b32.xlu0 %v42, 72
    %v44 = vpop.permute.xlu0 %43
    %vm45 = vcmask 654912
    %46 = vst.msk [vmem:[#allocation0] sm:$0x1] %vm45, %v44
    %s47 = scalar_lea.vmem %s0, 8
    %v48 = vld [vmem:[%s47] sm:$0x1]
    %49 = vrot.lane.b32.xlu0 %v48, 64
    %v50 = vpop.permute.xlu0 %49
    %vm51 = vcmask 589312
    %52 = vst.msk [vmem:[#allocation0] sm:$0x1] %vm51, %v50
    %s53 = scalar_lea.vmem %s0, 7
    %v54 = vld [vmem:[%s53] sm:$0x1]
    %55 = vrot.lane.b32.xlu0 %v54, 56
    %v56 = vpop.permute.xlu0 %55
    %vm57 = vcmask 523712
    %58 = vst.msk [vmem:[#allocation0] sm:$0x1] %vm57, %v56
    %s59 = scalar_lea.vmem %s0, 6
    %v60 = vld [vmem:[%s59] sm:$0x1]
    %61 = vrot.lane.b32.xlu0 %v60, 48
    %v62 = vpop.permute.xlu0 %61
    %vm63 = vcmask 458112
    %64 = vst.msk [vmem:[#allocation0] sm:$0x1] %vm63, %v62
    %s65 = scalar_lea.vmem %s0, 5
    %v66 = vld [vmem:[%s65] sm:$0x1]
    %67 = vrot.lane.b32.xlu0 %v66, 40
    %v68 = vpop.permute.xlu0 %67
    %vm69 = vcmask 392512
    %70 = vst.msk [vmem:[#allocation0] sm:$0x1] %vm69, %v68
    %s71 = scalar_lea.vmem %s0, 4
    %v72 = vld [vmem:[%s71] sm:$0x1]
    %73 = vrot.lane.b32.xlu0 %v72, 32
    %v74 = vpop.permute.xlu0 %73
    %vm75 = vcmask 326912
    %76 = vst.msk [vmem:[#allocation0] sm:$0x1] %vm75, %v74
    %s77 = scalar_lea.vmem %s0, 3
    %v78 = vld [vmem:[%s77] sm:$0x1]
    %79 = vrot.lane.b32.xlu0 %v78, 24
    %v80 = vpop.permute.xlu0 %79
    %vm81 = vcmask 261312
    %82 = vst.msk [vmem:[#allocation0] sm:$0x1] %vm81, %v80
    %s83 = scalar_lea.vmem %s0, 2
    %v84 = vld [vmem:[%s83] sm:$0x1]
    %85 = vrot.lane.b32.xlu0 %v84, 16
    %v86 = vpop.permute.xlu0 %85
    %vm87 = vcmask 195712
    %88 = vst.msk [vmem:[#allocation0] sm:$0x1] %vm87, %v86
    %s89 = scalar_lea.vmem %s0, 1
    %v90 = vld [vmem:[%s89] sm:$0x1]
    %91 = vrot.lane.b32.xlu0 %v90, 8
    %v92 = vpop.permute.xlu0 %91
    %vm93 = vcmask 130112
    %94 = vst.msk [vmem:[#allocation0] sm:$0x1] %vm93, %v92
    %s96 = sshll.u32 1, 1
    %s97 = ssub.s32 %s96, 1
    %v99 = vld [vmem:[#allocation0] sm:%s97]
    %s100 = sshll.u32 1, 1
    %s101 = ssub.s32 %s100, 1
    %102 = vst [vmem:[%s1] sm:%s101] %v99

// kernel: residual_block_forward.1
$region0: #{residual_block_forward.1}
  #allocation0 [shape = 'u32[]', space=smem, size = 0x4, offset = 0x4, fixed_abs, tag = 'smem constant byte address 0x4 - core index']
  #allocation1 [shape = 'u32[144,128]{1,0:T(1,128)}', space=vmem, size = 0x12000, scoped, tag = 'internal scratch']
  #allocation2 [shape = 'f32[2,18,128]{2,1,0:T(8,128)}', space=vmem, size = 0x6000, scoped, tag = 'scratch operand']
  %s0 = inlined_call_operand.vmem [shape: bf16[32,384], index: 0, kind: input, shape index: {}]
  %s1 = inlined_call_operand.vmem [shape: bf16[384,128], index: 1, kind: input, shape index: {}]
  %s2 = inlined_call_operand.vmem [shape: bf16[384,128], index: 2, kind: input, shape index: {}]
  %s3 = inlined_call_operand.vmem [shape: f32[32,128], index: 3, kind: input, shape index: {}]
  %s4 = inlined_call_operand.vmem [shape: f32[4,128], index: 4, kind: input, shape index: {}]
  %s5 = inlined_call_operand.vmem [shape: f32[128,128], index: 5, kind: input, shape index: {}]
  %s6 = inlined_call_operand.vmem [shape: f32[32,128], index: 6, kind: output, shape index: {}]
  %s7 = sld [smem:[#allocation0]]
  $region34: #{residual_block_forward.1} parent=0
    _
  %s9 = ssub.s32 1, %s7
  %s10 = scalar_select 0, %s9, %s7
  // Predicated region
  $region2: #{residual_block_forward.1} parent=0 // pred_check
    _
  $region3: #{residual_block_forward.1} parent=0 // pred_check_branch
    %12 = sbr.rel (0) target = $region5
  $region4: #{residual_block_forward.1} parent=0 // pred_region
    _
  $region5: #{residual_block_forward.1} parent=0 // pred_fallthru
    _
  // Predicated region
  $region6: #{residual_block_forward.1} parent=0 // pred_check
    _
  $region7: #{residual_block_forward.1} parent=0 // pred_check_branch
    %14 = sbr.rel (0) target = $region9
  $region8: #{residual_block_forward.1} parent=0 // pred_region
    _
  $region9: #{residual_block_forward.1} parent=0 // pred_fallthru
    _
  // Predicated region
  $region10: #{residual_block_forward.1} parent=0 // pred_check
    _
  $region11: #{residual_block_forward.1} parent=0 // pred_check_branch
    %16 = sbr.rel (0) target = $region13
  $region12: #{residual_block_forward.1} parent=0 // pred_region
    _
  $region13: #{residual_block_forward.1} parent=0 // pred_fallthru
    _
  // Predicated region
  $region14: #{residual_block_forward.1} parent=0 // pred_check
    _
  $region15: #{residual_block_forward.1} parent=0 // pred_check_branch
    %18 = sbr.rel (0) target = $region17
  $region16: #{residual_block_forward.1} parent=0 // pred_region
    _
  $region17: #{residual_block_forward.1} parent=0 // pred_fallthru
    _
  // Predicated region
  $region18: #{residual_block_forward.1} parent=0 // pred_check
    _
  $region19: #{residual_block_forward.1} parent=0 // pred_check_branch
    %20 = sbr.rel (0) target = $region21
  $region20: #{residual_block_forward.1} parent=0 // pred_region
    _
  $region21: #{residual_block_forward.1} parent=0 // pred_fallthru
    _
  // Predicated region
  $region22: #{residual_block_forward.1} parent=0 // pred_check
    _
  $region23: #{residual_block_forward.1} parent=0 // pred_check_branch
    %22 = sbr.rel (0) target = $region25
  $region24: #{residual_block_forward.1} parent=0 // pred_region
    _
  $region25: #{residual_block_forward.1} parent=0 // pred_fallthru
    _
  %v24 = vld [vmem:[%s0] sm:$0xff]
  %v25 = vld [vmem:[%s0 + $0x8] sm:$0xf]
  %v26 = vld [vmem:[%s0 + $0xc] sm:$0xff]
  %v27 = vld [vmem:[%s0 + $0x14] sm:$0xf]
  %v28 = vld [vmem:[%s0 + $0x18] sm:$0xff]
  %v29 = vld [vmem:[%s0 + $0x20] sm:$0xf]
  %v30 = vld [vmem:[%s0 + $0x24] sm:$0xff]
  %v31 = vld [vmem:[%s0 + $0x2c] sm:$0xf]
  %v32 = vld [vmem:[%s1] sm:$0xf]
  %v33 = vld [vmem:[%s1 + $0x4] sm:$0xf]
  %v34 = vld [vmem:[%s1 + $0x8] sm:$0xf]
  %v35 = vld [vmem:[%s1 + $0xc] sm:$0xf]
  %v36 = vld [vmem:[%s1 + $0x10] sm:$0xf]
  %v37 = vld [vmem:[%s1 + $0x14] sm:$0xf]
  %v38 = vld [vmem:[%s1 + $0x18] sm:$0xf]
  %v39 = vld [vmem:[%s1 + $0x1c] sm:$0xf]
  %v40 = vld [vmem:[%s1 + $0x20] sm:$0xf]
  %v41 = vld [vmem:[%s1 + $0x24] sm:$0xf]
  %v42 = vld [vmem:[%s1 + $0x28] sm:$0xf]
  %v43 = vld [vmem:[%s1 + $0x2c] sm:$0xf]
  %v44 = vld [vmem:[%s1 + $0x30] sm:$0xf]
  %v45 = vld [vmem:[%s1 + $0x34] sm:$0xf]
  %v46 = vld [vmem:[%s1 + $0x38] sm:$0xf]
  %v47 = vld [vmem:[%s1 + $0x3c] sm:$0xf]
  %v48 = vld [vmem:[%s1 + $0x40] sm:$0xf]
  %v49 = vld [vmem:[%s1 + $0x44] sm:$0xf]
  %v50 = vld [vmem:[%s1 + $0x48] sm:$0xf]
  %v51 = vld [vmem:[%s1 + $0x4c] sm:$0xf]
  %v52 = vld [vmem:[%s1 + $0x50] sm:$0xf]
  %v53 = vld [vmem:[%s1 + $0x54] sm:$0xf]
  %v54 = vld [vmem:[%s1 + $0x58] sm:$0xf]
  %v55 = vld [vmem:[%s1 + $0x5c] sm:$0xf]
  %v56 = vld [vmem:[%s1 + $0x60] sm:$0xf]
  %v57 = vld [vmem:[%s1 + $0x64] sm:$0xf]
  %v58 = vld [vmem:[%s1 + $0x68] sm:$0xf]
  %v59 = vld [vmem:[%s1 + $0x6c] sm:$0xf]
  %v60 = vld [vmem:[%s1 + $0x70] sm:$0xf]
  %v61 = vld [vmem:[%s1 + $0x74] sm:$0xf]
  %v62 = vld [vmem:[%s1 + $0x78] sm:$0xf]
  %v63 = vld [vmem:[%s1 + $0x7c] sm:$0xf]
  %v64 = vld [vmem:[%s1 + $0x80] sm:$0xf]
  %v65 = vld [vmem:[%s1 + $0x84] sm:$0xf]
  %v66 = vld [vmem:[%s1 + $0x88] sm:$0xf]
  %v67 = vld [vmem:[%s1 + $0x8c] sm:$0xf]
  %v68 = vld [vmem:[%s1 + $0x90] sm:$0xf]
  %v69 = vld [vmem:[%s1 + $0x94] sm:$0xf]
  %v70 = vld [vmem:[%s1 + $0x98] sm:$0xf]
  %v71 = vld [vmem:[%s1 + $0x9c] sm:$0xf]
  %v72 = vld [vmem:[%s1 + $0xa0] sm:$0xf]
  %v73 = vld [vmem:[%s1 + $0xa4] sm:$0xf]
  %v74 = vld [vmem:[%s1 + $0xa8] sm:$0xf]
  %v75 = vld [vmem:[%s1 + $0xac] sm:$0xf]
  %v76 = vld [vmem:[%s1 + $0xb0] sm:$0xf]
  %v77 = vld [vmem:[%s1 + $0xb4] sm:$0xf]
  %v78 = vld [vmem:[%s1 + $0xb8] sm:$0xf]
  %v79 = vld [vmem:[%s1 + $0xbc] sm:$0xf]
  %v88 = vunpack.c.l.b16 %v24
  %v89 = vunpack.c.h.b16 %v24
  %v90 = vunpack.c.l.b16 %v25
  %v91 = vunpack.c.l.b16 %v26
  %v92 = vunpack.c.h.b16 %v26
  %v93 = vunpack.c.l.b16 %v27
  %v94 = vunpack.c.l.b16 %v28
  %v95 = vunpack.c.h.b16 %v28
  %v96 = vunpack.c.l.b16 %v29
  %v97 = vunpack.c.l.b16 %v30
  %v98 = vunpack.c.h.b16 %v30
  %v99 = vunpack.c.l.b16 %v31
  %v100 = vpack.c.b16 %v91, %v88
  %v101 = vpack.c.b16 %v92, %v89
  %v102 = vpack.c.b16 %v93, %v90
  %v103 = vpack.c.b16 %v97, %v94
  %v104 = vpack.c.b16 %v98, %v95
  %v105 = vpack.c.b16 %v99, %v96
  %v160 = vunpack.c.l.b16 %v32
  %v161 = vunpack.c.l.b16 %v33
  %v162 = vunpack.c.l.b16 %v34
  %v163 = vunpack.c.l.b16 %v35
  %v164 = vunpack.c.l.b16 %v36
  %v165 = vunpack.c.l.b16 %v37
  %v166 = vunpack.c.l.b16 %v38
  %v167 = vunpack.c.l.b16 %v39
  %v168 = vunpack.c.l.b16 %v40
  %v169 = vunpack.c.l.b16 %v41
  %v170 = vunpack.c.l.b16 %v42
  %v171 = vunpack.c.l.b16 %v43
  %v172 = vunpack.c.l.b16 %v44
  %v173 = vunpack.c.l.b16 %v45
  %v174 = vunpack.c.l.b16 %v46
  %v175 = vunpack.c.l.b16 %v47
  %v176 = vunpack.c.l.b16 %v48
  %v177 = vunpack.c.l.b16 %v49
  %v178 = vunpack.c.l.b16 %v50
  %v179 = vunpack.c.l.b16 %v51
  %v180 = vunpack.c.l.b16 %v52
  %v181 = vunpack.c.l.b16 %v53
  %v182 = vunpack.c.l.b16 %v54
  %v183 = vunpack.c.l.b16 %v55
  %v184 = vunpack.c.l.b16 %v56
  %v185 = vunpack.c.l.b16 %v57
  %v186 = vunpack.c.l.b16 %v58
  %v187 = vunpack.c.l.b16 %v59
  %v188 = vunpack.c.l.b16 %v60
  %v189 = vunpack.c.l.b16 %v61
  %v190 = vunpack.c.l.b16 %v62
  %v191 = vunpack.c.l.b16 %v63
  %v192 = vunpack.c.l.b16 %v64
  %v193 = vunpack.c.l.b16 %v65
  %v194 = vunpack.c.l.b16 %v66
  %v195 = vunpack.c.l.b16 %v67
  %v196 = vunpack.c.l.b16 %v68
  %v197 = vunpack.c.l.b16 %v69
  %v198 = vunpack.c.l.b16 %v70
  %v199 = vunpack.c.l.b16 %v71
  %v200 = vunpack.c.l.b16 %v72
  %v201 = vunpack.c.l.b16 %v73
  %v202 = vunpack.c.l.b16 %v74
  %v203 = vunpack.c.l.b16 %v75
  %v204 = vunpack.c.l.b16 %v76
  %v205 = vunpack.c.l.b16 %v77
  %v206 = vunpack.c.l.b16 %v78
  %v207 = vunpack.c.l.b16 %v79
  %v208 = vpack.c.b16 %v161, %v160
  %v209 = vpack.c.b16 %v163, %v162
  %v210 = vpack.c.b16 %v165, %v164
  %v211 = vpack.c.b16 %v167, %v166
  %v212 = vpack.c.b16 %v169, %v168
  %v213 = vpack.c.b16 %v171, %v170
  %v214 = vpack.c.b16 %v173, %v172
  %v215 = vpack.c.b16 %v175, %v174
  %v216 = vpack.c.b16 %v177, %v176
  %v217 = vpack.c.b16 %v179, %v178
  %v218 = vpack.c.b16 %v181, %v180
  %v219 = vpack.c.b16 %v183, %v182
  %v220 = vpack.c.b16 %v185, %v184
  %v221 = vpack.c.b16 %v187, %v186
  %v222 = vpack.c.b16 %v189, %v188
  %v223 = vpack.c.b16 %v191, %v190
  %v224 = vpack.c.b16 %v193, %v192
  %v225 = vpack.c.b16 %v195, %v194
  %v226 = vpack.c.b16 %v197, %v196
  %v227 = vpack.c.b16 %v199, %v198
  %v228 = vpack.c.b16 %v201, %v200
  %v229 = vpack.c.b16 %v203, %v202
  %v230 = vpack.c.b16 %v205, %v204
  %v231 = vpack.c.b16 %v207, %v206
  %256 = vmatprep.subr.bf16.mxu0 0
  %257 = vmatpush1.bf16.msra.mxu0 %v215
  %258 = vmatprep.subr.bf16.mxu0 0
  %259 = vmatpush1.bf16.msra.mxu0 %v214
  %260 = vmatprep.subr.bf16.mxu0 0
  %261 = vmatpush1.bf16.msra.mxu0 %v213
  %262 = vmatprep.subr.bf16.mxu0 0
  %263 = vmatpush1.bf16.msra.mxu0 %v212
  %264 = vmatprep.subr.bf16.mxu0 0
  %265 = vmatpush1.bf16.msra.mxu0 %v211
  %266 = vmatprep.subr.bf16.mxu0 0
  %267 = vmatpush1.bf16.msra.mxu0 %v210
  %268 = vmatprep.subr.bf16.mxu0 0
  %269 = vmatpush1.bf16.msra.mxu0 %v209
  %270 = vmatprep.subr.bf16.mxu0 0
  %271 = vmatpush1.bf16.msra.mxu0 %v208
  %272 = vmatprep.subr.bf16.mxu0 0
  %273 = vmatpush2.bf16.msra.mxu0 %v223
  %274 = vmatprep.subr.bf16.mxu0 0
  %275 = vmatpush2.bf16.msra.mxu0 %v222
  %276 = vmatprep.subr.bf16.mxu0 0
  %277 = vmatpush2.bf16.msra.mxu0 %v221
  %278 = vmatprep.subr.bf16.mxu0 0
  %279 = vmatpush2.bf16.msra.mxu0 %v220
  %280 = vmatprep.subr.bf16.mxu0 0
  %281 = vmatpush2.bf16.msra.mxu0 %v219
  %282 = vmatprep.subr.bf16.mxu0 0
  %283 = vmatpush2.bf16.msra.mxu0 %v218
  %284 = vmatprep.subr.bf16.mxu0 0
  %285 = vmatpush2.bf16.msra.mxu0 %v217
  %286 = vmatprep.subr.bf16.mxu0 0
  %287 = vmatpush2.bf16.msra.mxu0 %v216
  %288 = vmatprep.mubr.bf16.mxu0 %v101
  %289 = vmatmul.mubr.bf16.gmra.mxu0 %v100
  %v290 = vpop.f32.mrf.mxu0
  %v291 = vadd.f32 0.0, %v290
  %v292 = vpop.f32.mrf.mxu0
  %v293 = vpop.f32.mrf.mxu0
  %v294 = vadd.f32 0.0, %v293
  %v295 = vpop.f32.mrf.mxu0
  %296 = vmatprep.mubr.bf16.mxu0 %v104
  %297 = vmatmul.mubr.bf16.gmra.mxu0 %v103
  %v298 = vpop.f32.mrf.mxu0
  %v299 = vadd.f32 0.0, %v298
  %v300 = vpop.f32.mrf.mxu0
  %v301 = vpop.f32.mrf.mxu0
  %v302 = vadd.f32 0.0, %v301
  %v303 = vpop.f32.mrf.mxu0
  %304 = vdwg.mxu0
  %305 = vmatprep.subr.bf16.mxu0 0
  %306 = vmatpush1.bf16.msra.mxu0 %v231
  %307 = vmatprep.subr.bf16.mxu0 0
  %308 = vmatpush1.bf16.msra.mxu0 %v230
  %309 = vmatprep.subr.bf16.mxu0 0
  %310 = vmatpush1.bf16.msra.mxu0 %v229
  %311 = vmatprep.subr.bf16.mxu0 0
  %312 = vmatpush1.bf16.msra.mxu0 %v228
  %313 = vmatprep.subr.bf16.mxu0 0
  %314 = vmatpush1.bf16.msra.mxu0 %v227
  %315 = vmatprep.subr.bf16.mxu0 0
  %316 = vmatpush1.bf16.msra.mxu0 %v226
  %317 = vmatprep.subr.bf16.mxu0 0
  %318 = vmatpush1.bf16.msra.mxu0 %v225
  %319 = vmatprep.subr.bf16.mxu0 0
  %320 = vmatpush1.bf16.msra.mxu0 %v224
  %321 = vmatprep.subr.bf16.mxu0 0
  %322 = vmatpush2.bf16.msra.mxu0 0
  %323 = vmatprep.subr.bf16.mxu0 0
  %324 = vmatpush2.bf16.msra.mxu0 0
  %325 = vmatprep.subr.bf16.mxu0 0
  %326 = vmatpush2.bf16.msra.mxu0 0
  %327 = vmatprep.subr.bf16.mxu0 0
  %328 = vmatpush2.bf16.msra.mxu0 0
  %329 = vmatprep.subr.bf16.mxu0 0
  %330 = vmatpush2.bf16.msra.mxu0 0
  %331 = vmatprep.subr.bf16.mxu0 0
  %332 = vmatpush2.bf16.msra.mxu0 0
  %333 = vmatprep.subr.bf16.mxu0 0
  %334 = vmatpush2.bf16.msra.mxu0 0
  %335 = vmatprep.subr.bf16.mxu0 0
  %336 = vmatpush2.bf16.msra.mxu0 0
  %337 = vmatprep.mubr.bf16.mxu0 0
  %338 = vmatmul.mubr.bf16.gmra.mxu0 %v102
  %v339 = vpop.f32.mrf.mxu0
  %v340 = vadd.f32 %v291, %v339
  %v341 = vpop.f32.mrf.mxu0
  %v342 = vpop.f32.mrf.mxu0
  %v343 = vadd.f32 %v294, %v342
  %v344 = vpop.f32.mrf.mxu0
  %345 = vmatprep.mubr.bf16.mxu0 0
  %346 = vmatmul.mubr.bf16.gmra.mxu0 %v105
  %v347 = vpop.f32.mrf.mxu0
  %v348 = vadd.f32 %v299, %v347
  %v349 = vpop.f32.mrf.mxu0
  %v350 = vpop.f32.mrf.mxu0
  %v351 = vadd.f32 %v302, %v350
  %v352 = vpop.f32.mrf.mxu0
  %353 = vdwg.mxu0
  %v354 = vld [vmem:[%s4] sm:$0x1]
  %v355 = vld [vmem:[%s4 + $0x1] sm:$0x1]
  %v356 = vadd.f32 %v340, %v343
  %v357 = vadd.f32 %v356, %v348
  %v358 = vadd.f32 %v357, %v351
  %v359 = vrot.slane %v358, 4
  %v360 = vadd.f32 %v358, %v359
  %v361 = vrot.slane %v360, 2
  %v362 = vadd.f32 %v360, %v361
  %v363 = vrot.slane %v362, 1
  %v364 = vadd.f32 %v362, %v363
  %v365 = vmul.f32 %v340, %v340
  %v366 = vmul.f32 %v343, %v343
  %v367 = vmul.f32 %v348, %v348
  %v368 = vmul.f32 %v351, %v351
  %v369 = vadd.f32 %v365, %v366
  %v370 = vadd.f32 %v369, %v367
  %v371 = vadd.f32 %v370, %v368
  %v372 = vrot.slane %v371, 4
  %v373 = vadd.f32 %v371, %v372
  %v374 = vrot.slane %v373, 2
  %v375 = vadd.f32 %v373, %v374
  %v376 = vrot.slane %v375, 1
  %v377 = vadd.f32 %v375, %v376
  %v378 = vld [vmem:[%s5] sm:$0xff]
  %v379 = vld [vmem:[%s5 + $0x8] sm:$0xff]
  %v380 = vld [vmem:[%s5 + $0x10] sm:$0xff]
  %v381 = vld [vmem:[%s5 + $0x18] sm:$0xff]
  %v382 = vld [vmem:[%s5 + $0x20] sm:$0xff]
  %v383 = vld [vmem:[%s5 + $0x28] sm:$0xff]
  %v384 = vld [vmem:[%s5 + $0x30] sm:$0xff]
  %v385 = vld [vmem:[%s5 + $0x38] sm:$0xff]
  %v386 = vld [vmem:[%s5 + $0x40] sm:$0xff]
  %v387 = vld [vmem:[%s5 + $0x48] sm:$0xff]
  %v388 = vld [vmem:[%s5 + $0x50] sm:$0xff]
  %v389 = vld [vmem:[%s5 + $0x58] sm:$0xff]
  %v390 = vld [vmem:[%s5 + $0x60] sm:$0xff]
  %v391 = vld [vmem:[%s5 + $0x68] sm:$0xff]
  %v392 = vld [vmem:[%s5 + $0x70] sm:$0xff]
  %v393 = vld [vmem:[%s5 + $0x78] sm:$0xff]
  %394 = vmatprep.subr.mxu0 0.0
  %395 = vmatpush1.msra.mxu0 %v393
  %396 = vmatprep.subr.mxu0 0.0
  %397 = vmatpush1.msra.mxu0 %v392
  %398 = vmatprep.subr.mxu0 0.0
  %399 = vmatpush1.msra.mxu0 %v391
  %400 = vmatprep.subr.mxu0 0.0
  %401 = vmatpush1.msra.mxu0 %v390
  %402 = vmatprep.subr.mxu0 0.0
  %403 = vmatpush1.msra.mxu0 %v389
  %404 = vmatprep.subr.mxu0 0.0
  %405 = vmatpush1.msra.mxu0 %v388
  %406 = vmatprep.subr.mxu0 0.0
  %407 = vmatpush1.msra.mxu0 %v387
  %408 = vmatprep.subr.mxu0 0.0
  %409 = vmatpush1.msra.mxu0 %v386
  %410 = vmatprep.subr.mxu0 0.0
  %411 = vmatpush1.msra.mxu0 %v385
  %412 = vmatprep.subr.mxu0 0.0
  %413 = vmatpush1.msra.mxu0 %v384
  %414 = vmatprep.subr.mxu0 0.0
  %415 = vmatpush1.msra.mxu0 %v383
  %416 = vmatprep.subr.mxu0 0.0
  %417 = vmatpush1.msra.mxu0 %v382
  %418 = vmatprep.subr.mxu0 0.0
  %419 = vmatpush1.msra.mxu0 %v381
  %420 = vmatprep.subr.mxu0 0.0
  %421 = vmatpush1.msra.mxu0 %v380
  %422 = vmatprep.subr.mxu0 0.0
  %423 = vmatpush1.msra.mxu0 %v379
  %424 = vmatprep.subr.mxu0 0.0
  %425 = vmatpush1.msra.mxu0 %v378
  %426 = vmatprep.subr.mxu0 0.0
  %427 = vmatpush2.msra.mxu0 0.0
  %428 = vmatprep.subr.mxu0 0.0
  %429 = vmatpush2.msra.mxu0 0.0
  %430 = vmatprep.subr.mxu0 0.0
  %431 = vmatpush2.msra.mxu0 0.0
  %432 = vmatprep.subr.mxu0 0.0
  %433 = vmatpush2.msra.mxu0 0.0
  %434 = vmatprep.subr.mxu0 0.0
  %435 = vmatpush2.msra.mxu0 0.0
  %436 = vmatprep.subr.mxu0 0.0
  %437 = vmatpush2.msra.mxu0 0.0
  %438 = vmatprep.subr.mxu0 0.0
  %439 = vmatpush2.msra.mxu0 0.0
  %440 = vmatprep.subr.mxu0 0.0
  %441 = vmatpush2.msra.mxu0 0.0
  %442 = vmatprep.subr.mxu0 0.0
  %443 = vmatpush2.msra.mxu0 0.0
  %444 = vmatprep.subr.mxu0 0.0
  %445 = vmatpush2.msra.mxu0 0.0
  %446 = vmatprep.subr.mxu0 0.0
  %447 = vmatpush2.msra.mxu0 0.0
  %448 = vmatprep.subr.mxu0 0.0
  %449 = vmatpush2.msra.mxu0 0.0
  %450 = vmatprep.subr.mxu0 0.0
  %451 = vmatpush2.msra.mxu0 0.0
  %452 = vmatprep.subr.mxu0 0.0
  %453 = vmatpush2.msra.mxu0 0.0
  %454 = vmatprep.subr.mxu0 0.0
  %455 = vmatpush2.msra.mxu0 0.0
  %456 = vmatprep.subr.mxu0 0.0
  %457 = vmatpush2.msra.mxu0 0.0
  %458 = vmatprep.mubr.f32.mxu0 0.0
  %459 = vmatmul.mubr.f32.gmra.mxu0 %v364
  %v460 = vpop.f32.mrf.mxu0
  %v461 = vadd.f32 0.0, %v460
  %v462 = vpop.f32.mrf.mxu0
  %463 = vdwg.mxu0
  %464 = vmatprep.subr.mxu0 0.0
  %465 = vmatpush1.msra.mxu0 %v393
  %466 = vmatprep.subr.mxu0 0.0
  %467 = vmatpush1.msra.mxu0 %v392
  %468 = vmatprep.subr.mxu0 0.0
  %469 = vmatpush1.msra.mxu0 %v391
  %470 = vmatprep.subr.mxu0 0.0
  %471 = vmatpush1.msra.mxu0 %v390
  %472 = vmatprep.subr.mxu0 0.0
  %473 = vmatpush1.msra.mxu0 %v389
  %474 = vmatprep.subr.mxu0 0.0
  %475 = vmatpush1.msra.mxu0 %v388
  %476 = vmatprep.subr.mxu0 0.0
  %477 = vmatpush1.msra.mxu0 %v387
  %478 = vmatprep.subr.mxu0 0.0
  %479 = vmatpush1.msra.mxu0 %v386
  %480 = vmatprep.subr.mxu0 0.0
  %481 = vmatpush1.msra.mxu0 %v385
  %482 = vmatprep.subr.mxu0 0.0
  %483 = vmatpush1.msra.mxu0 %v384
  %484 = vmatprep.subr.mxu0 0.0
  %485 = vmatpush1.msra.mxu0 %v383
  %486 = vmatprep.subr.mxu0 0.0
  %487 = vmatpush1.msra.mxu0 %v382
  %488 = vmatprep.subr.mxu0 0.0
  %489 = vmatpush1.msra.mxu0 %v381
  %490 = vmatprep.subr.mxu0 0.0
  %491 = vmatpush1.msra.mxu0 %v380
  %492 = vmatprep.subr.mxu0 0.0
  %493 = vmatpush1.msra.mxu0 %v379
  %494 = vmatprep.subr.mxu0 0.0
  %495 = vmatpush1.msra.mxu0 %v378
  %496 = vmatprep.subr.mxu0 0.0
  %497 = vmatpush2.msra.mxu0 0.0
  %498 = vmatprep.subr.mxu0 0.0
  %499 = vmatpush2.msra.mxu0 0.0
  %500 = vmatprep.subr.mxu0 0.0
  %501 = vmatpush2.msra.mxu0 0.0
  %502 = vmatprep.subr.mxu0 0.0
  %503 = vmatpush2.msra.mxu0 0.0
  %504 = vmatprep.subr.mxu0 0.0
  %505 = vmatpush2.msra.mxu0 0.0
  %506 = vmatprep.subr.mxu0 0.0
  %507 = vmatpush2.msra.mxu0 0.0
  %508 = vmatprep.subr.mxu0 0.0
  %509 = vmatpush2.msra.mxu0 0.0
  %510 = vmatprep.subr.mxu0 0.0
  %511 = vmatpush2.msra.mxu0 0.0
  %512 = vmatprep.subr.mxu0 0.0
  %513 = vmatpush2.msra.mxu0 0.0
  %514 = vmatprep.subr.mxu0 0.0
  %515 = vmatpush2.msra.mxu0 0.0
  %516 = vmatprep.subr.mxu0 0.0
  %517 = vmatpush2.msra.mxu0 0.0
  %518 = vmatprep.subr.mxu0 0.0
  %519 = vmatpush2.msra.mxu0 0.0
  %520 = vmatprep.subr.mxu0 0.0
  %521 = vmatpush2.msra.mxu0 0.0
  %522 = vmatprep.subr.mxu0 0.0
  %523 = vmatpush2.msra.mxu0 0.0
  %524 = vmatprep.subr.mxu0 0.0
  %525 = vmatpush2.msra.mxu0 0.0
  %526 = vmatprep.subr.mxu0 0.0
  %527 = vmatpush2.msra.mxu0 0.0
  %528 = vmatprep.mubr.f32.mxu0 0.0
  %529 = vmatmul.mubr.f32.gmra.mxu0 %v377
  %v530 = vpop.f32.mrf.mxu0
  %v531 = vadd.f32 0.0, %v530
  %v532 = vpop.f32.mrf.mxu0
  %533 = vdwg.mxu0
  %v534 = vmul.f32 %v461, %v461
  %v535 = vsub.f32 %v531, %v534
  %v536 = vadd.f32 %v535, 1e-05
  %v537 = vrsqrt.pop %v536
  %v538 = vmul.f32 %v537, %v354
  %v539 = vmul.f32 %v461, %v538
  %v540 = vsub.f32 %v355, %v539
  %v541 = vlaneseq
  %v542 = vshrl.u32 %v541, 7
  %v543 = vsub.s32 0, %v542
  %v544 = vrot.slane %v538, %v543
  %v545 = vmul.f32 %v340, %v544
  %v546 = vmul.f32 %v343, %v544
  %v547 = vmul.f32 %v348, %v544
  %v548 = vmul.f32 %v351, %v544
  %v549 = vlaneseq
  %v550 = vshrl.u32 %v549, 7
  %v551 = vsub.s32 0, %v550
  %v552 = vrot.slane %v540, %v551
  %v553 = vadd.f32 %v545, %v552
  %v554 = vadd.f32 %v546, %v552
  %v555 = vadd.f32 %v547, %v552
  %v556 = vadd.f32 %v548, %v552
  %v557 = vsub.f32 0.0, %v553
  %v558 = vsub.f32 0.0, %v554
  %v559 = vsub.f32 0.0, %v555
  %v560 = vsub.f32 0.0, %v556
  %v561 = vmul.f32 %v557, 1.442695
  %v562 = vpow.pop %v561
  %v563 = vmul.f32 %v558, 1.442695
  %v564 = vpow.pop %v563
  %v565 = vmul.f32 %v559, 1.442695
  %v566 = vpow.pop %v565
  %v567 = vmul.f32 %v560, 1.442695
  %v568 = vpow.pop %v567
  %v569 = vadd.f32 %v562, 1.0
  %v570 = vadd.f32 %v564, 1.0
  %v571 = vadd.f32 %v566, 1.0
  %v572 = vadd.f32 %v568, 1.0
  %v573 = vrcp.pop %v569
  %v574 = vrcp.pop %v570
  %v575 = vrcp.pop %v571
  %v576 = vrcp.pop %v572
  %v577 = vmul.f32 %v553, %v573
  %v578 = vmul.f32 %v554, %v574
  %v579 = vmul.f32 %v555, %v575
  %v580 = vmul.f32 %v556, %v576
  %581 = vst [vmem:[#allocation2] sm:$0x1] 0.0
  %582 = vst [vmem:[#allocation2 + $0x18] sm:$0x1] 0.0
  %583 = vst [vmem:[#allocation2 + $0x11] sm:$0x1] 0.0
  %584 = vst [vmem:[#allocation2 + $0x29] sm:$0x1] 0.0
  %585 = vst [vmem:[#allocation2 + $0x1] sm:$0xff] %v577
  %586 = vst [vmem:[#allocation2 + $0x9] sm:$0xff] %v578
  %587 = vst [vmem:[#allocation2 + $0x19] sm:$0xff] %v579
  %588 = vst [vmem:[#allocation2 + $0x21] sm:$0xff] %v580
  %v589 = vld [vmem:[#allocation2] sm:$0xff]
  %v590 = vld [vmem:[#allocation2 + $0x8] sm:$0xff]
  %v591 = vld [vmem:[#allocation2 + $0x10] sm:$0x3]
  %v592 = vld [vmem:[#allocation2 + $0x18] sm:$0xff]
  %v593 = vld [vmem:[#allocation2 + $0x20] sm:$0xff]
  %v594 = vld [vmem:[#allocation2 + $0x28] sm:$0x3]
  %vm601 = vcmask 1046528
  %v602 = vrot.slane %v589, 1
  %v603 = vrot.slane %v590, 1
  %v604 = vsel %vm601, %v602, %v603
  %v605 = vrot.slane %v591, 1
  %v606 = vsel %vm601, %v603, %v605
  %v607 = vrot.slane %v592, 1
  %v608 = vrot.slane %v593, 1
  %v609 = vsel %vm601, %v607, %v608
  %v610 = vrot.slane %v594, 1
  %v611 = vsel %vm601, %v608, %v610
  %vm616 = vcmask 1045504
  %v617 = vrot.slane %v589, 2
  %v618 = vrot.slane %v590, 2
  %v619 = vsel %vm616, %v617, %v618
  %v620 = vrot.slane %v591, 2
  %v621 = vsel %vm616, %v618, %v620
  %v622 = vrot.slane %v592, 2
  %v623 = vrot.slane %v593, 2
  %v624 = vsel %vm616, %v622, %v623
  %v625 = vrot.slane %v594, 2
  %v626 = vsel %vm616, %v623, %v625
  %v631 = vpack.c.bf16 %v590, %v589
  %v632 = vpack.c.bf16 %v606, %v604
  %v633 = vpack.c.bf16 %v621, %v619
  %v634 = vpack.c.bf16 %v593, %v592
  %v635 = vpack.c.bf16 %v611, %v609
  %v636 = vpack.c.bf16 %v626, %v624
  %v637 = vld [vmem:[%s2] sm:$0xf]
  %v638 = vld [vmem:[%s2 + $0x4] sm:$0xf]
  %v639 = vld [vmem:[%s2 + $0x8] sm:$0xf]
  %v640 = vld [vmem:[%s2 + $0xc] sm:$0xf]
  %v641 = vld [vmem:[%s2 + $0x10] sm:$0xf]
  %v642 = vld [vmem:[%s2 + $0x14] sm:$0xf]
  %v643 = vld [vmem:[%s2 + $0x18] sm:$0xf]
  %v644 = vld [vmem:[%s2 + $0x1c] sm:$0xf]
  %v645 = vld [vmem:[%s2 + $0x20] sm:$0xf]
  %v646 = vld [vmem:[%s2 + $0x24] sm:$0xf]
  %v647 = vld [vmem:[%s2 + $0x28] sm:$0xf]
  %v648 = vld [vmem:[%s2 + $0x2c] sm:$0xf]
  %v649 = vld [vmem:[%s2 + $0x30] sm:$0xf]
  %v650 = vld [vmem:[%s2 + $0x34] sm:$0xf]
  %v651 = vld [vmem:[%s2 + $0x38] sm:$0xf]
  %v652 = vld [vmem:[%s2 + $0x3c] sm:$0xf]
  %v653 = vld [vmem:[%s2 + $0x40] sm:$0xf]
  %v654 = vld [vmem:[%s2 + $0x44] sm:$0xf]
  %v655 = vld [vmem:[%s2 + $0x48] sm:$0xf]
  %v656 = vld [vmem:[%s2 + $0x4c] sm:$0xf]
  %v657 = vld [vmem:[%s2 + $0x50] sm:$0xf]
  %v658 = vld [vmem:[%s2 + $0x54] sm:$0xf]
  %v659 = vld [vmem:[%s2 + $0x58] sm:$0xf]
  %v660 = vld [vmem:[%s2 + $0x5c] sm:$0xf]
  %v661 = vld [vmem:[%s2 + $0x60] sm:$0xf]
  %v662 = vld [vmem:[%s2 + $0x64] sm:$0xf]
  %v663 = vld [vmem:[%s2 + $0x68] sm:$0xf]
  %v664 = vld [vmem:[%s2 + $0x6c] sm:$0xf]
  %v665 = vld [vmem:[%s2 + $0x70] sm:$0xf]
  %v666 = vld [vmem:[%s2 + $0x74] sm:$0xf]
  %v667 = vld [vmem:[%s2 + $0x78] sm:$0xf]
  %v668 = vld [vmem:[%s2 + $0x7c] sm:$0xf]
  %v669 = vld [vmem:[%s2 + $0x80] sm:$0xf]
  %v670 = vld [vmem:[%s2 + $0x84] sm:$0xf]
  %v671 = vld [vmem:[%s2 + $0x88] sm:$0xf]
  %v672 = vld [vmem:[%s2 + $0x8c] sm:$0xf]
  %v673 = vld [vmem:[%s2 + $0x90] sm:$0xf]
  %v674 = vld [vmem:[%s2 + $0x94] sm:$0xf]
  %v675 = vld [vmem:[%s2 + $0x98] sm:$0xf]
  %v676 = vld [vmem:[%s2 + $0x9c] sm:$0xf]
  %v677 = vld [vmem:[%s2 + $0xa0] sm:$0xf]
  %v678 = vld [vmem:[%s2 + $0xa4] sm:$0xf]
  %v679 = vld [vmem:[%s2 + $0xa8] sm:$0xf]
  %v680 = vld [vmem:[%s2 + $0xac] sm:$0xf]
  %v681 = vld [vmem:[%s2 + $0xb0] sm:$0xf]
  %v682 = vld [vmem:[%s2 + $0xb4] sm:$0xf]
  %v683 = vld [vmem:[%s2 + $0xb8] sm:$0xf]
  %v684 = vld [vmem:[%s2 + $0xbc] sm:$0xf]
  %v733 = vunpack.c.l.b16 %v637
  %v734 = vunpack.c.l.b16 %v638
  %v735 = vunpack.c.l.b16 %v639
  %v736 = vunpack.c.l.b16 %v640
  %v737 = vunpack.c.l.b16 %v641
  %v738 = vunpack.c.l.b16 %v642
  %v739 = vunpack.c.l.b16 %v643
  %v740 = vunpack.c.l.b16 %v644
  %v741 = vunpack.c.l.b16 %v645
  %v742 = vunpack.c.l.b16 %v646
  %v743 = vunpack.c.l.b16 %v647
  %v744 = vunpack.c.l.b16 %v648
  %v745 = vunpack.c.l.b16 %v649
  %v746 = vunpack.c.l.b16 %v650
  %v747 = vunpack.c.l.b16 %v651
  %v748 = vunpack.c.l.b16 %v652
  %v749 = vunpack.c.l.b16 %v653
  %v750 = vunpack.c.l.b16 %v654
  %v751 = vunpack.c.l.b16 %v655
  %v752 = vunpack.c.l.b16 %v656
  %v753 = vunpack.c.l.b16 %v657
  %v754 = vunpack.c.l.b16 %v658
  %v755 = vunpack.c.l.b16 %v659
  %v756 = vunpack.c.l.b16 %v660
  %v757 = vunpack.c.l.b16 %v661
  %v758 = vunpack.c.l.b16 %v662
  %v759 = vunpack.c.l.b16 %v663
  %v760 = vunpack.c.l.b16 %v664
  %v761 = vunpack.c.l.b16 %v665
  %v762 = vunpack.c.l.b16 %v666
  %v763 = vunpack.c.l.b16 %v667
  %v764 = vunpack.c.l.b16 %v668
  %v765 = vunpack.c.l.b16 %v669
  %v766 = vunpack.c.l.b16 %v670
  %v767 = vunpack.c.l.b16 %v671
  %v768 = vunpack.c.l.b16 %v672
  %v769 = vunpack.c.l.b16 %v673
  %v770 = vunpack.c.l.b16 %v674
  %v771 = vunpack.c.l.b16 %v675
  %v772 = vunpack.c.l.b16 %v676
  %v773 = vunpack.c.l.b16 %v677
  %v774 = vunpack.c.l.b16 %v678
  %v775 = vunpack.c.l.b16 %v679
  %v776 = vunpack.c.l.b16 %v680
  %v777 = vunpack.c.l.b16 %v681
  %v778 = vunpack.c.l.b16 %v682
  %v779 = vunpack.c.l.b16 %v683
  %v780 = vunpack.c.l.b16 %v684
  %v781 = vpack.c.b16 %v734, %v733
  %v782 = vpack.c.b16 %v736, %v735
  %v783 = vpack.c.b16 %v738, %v737
  %v784 = vpack.c.b16 %v740, %v739
  %v785 = vpack.c.b16 %v742, %v741
  %v786 = vpack.c.b16 %v744, %v743
  %v787 = vpack.c.b16 %v746, %v745
  %v788 = vpack.c.b16 %v748, %v747
  %v789 = vpack.c.b16 %v750, %v749
  %v790 = vpack.c.b16 %v752, %v751
  %v791 = vpack.c.b16 %v754, %v753
  %v792 = vpack.c.b16 %v756, %v755
  %v793 = vpack.c.b16 %v758, %v757
  %v794 = vpack.c.b16 %v760, %v759
  %v795 = vpack.c.b16 %v762, %v761
  %v796 = vpack.c.b16 %v764, %v763
  %v797 = vpack.c.b16 %v766, %v765
  %v798 = vpack.c.b16 %v768, %v767
  %v799 = vpack.c.b16 %v770, %v769
  %v800 = vpack.c.b16 %v772, %v771
  %v801 = vpack.c.b16 %v774, %v773
  %v802 = vpack.c.b16 %v776, %v775
  %v803 = vpack.c.b16 %v778, %v777
  %v804 = vpack.c.b16 %v780, %v779
  %829 = vmatprep.subr.bf16.mxu0 0
  %830 = vmatpush1.bf16.msra.mxu0 %v788
  %831 = vmatprep.subr.bf16.mxu0 0
  %832 = vmatpush1.bf16.msra.mxu0 %v787
  %833 = vmatprep.subr.bf16.mxu0 0
  %834 = vmatpush1.bf16.msra.mxu0 %v786
  %835 = vmatprep.subr.bf16.mxu0 0
  %836 = vmatpush1.bf16.msra.mxu0 %v785
  %837 = vmatprep.subr.bf16.mxu0 0
  %838 = vmatpush1.bf16.msra.mxu0 %v784
  %839 = vmatprep.subr.bf16.mxu0 0
  %840 = vmatpush1.bf16.msra.mxu0 %v783
  %841 = vmatprep.subr.bf16.mxu0 0
  %842 = vmatpush1.bf16.msra.mxu0 %v782
  %843 = vmatprep.subr.bf16.mxu0 0
  %844 = vmatpush1.bf16.msra.mxu0 %v781
  %845 = vmatprep.subr.bf16.mxu0 0
  %846 = vmatpush2.bf16.msra.mxu0 %v796
  %847 = vmatprep.subr.bf16.mxu0 0
  %848 = vmatpush2.bf16.msra.mxu0 %v795
  %849 = vmatprep.subr.bf16.mxu0 0
  %850 = vmatpush2.bf16.msra.mxu0 %v794
  %851 = vmatprep.subr.bf16.mxu0 0
  %852 = vmatpush2.bf16.msra.mxu0 %v793
  %853 = vmatprep.subr.bf16.mxu0 0
  %854 = vmatpush2.bf16.msra.mxu0 %v792
  %855 = vmatprep.subr.bf16.mxu0 0
  %856 = vmatpush2.bf16.msra.mxu0 %v791
  %857 = vmatprep.subr.bf16.mxu0 0
  %858 = vmatpush2.bf16.msra.mxu0 %v790
  %859 = vmatprep.subr.bf16.mxu0 0
  %860 = vmatpush2.bf16.msra.mxu0 %v789
  %861 = vmatprep.mubr.bf16.mxu0 %v632
  %862 = vmatmul.mubr.bf16.gmra.mxu0 %v631
  %v863 = vpop.f32.mrf.mxu0
  %v864 = vadd.f32 0.0, %v863
  %v865 = vpop.f32.mrf.mxu0
  %v866 = vpop.f32.mrf.mxu0
  %v867 = vadd.f32 0.0, %v866
  %v868 = vpop.f32.mrf.mxu0
  %869 = vmatprep.mubr.bf16.mxu0 %v635
  %870 = vmatmul.mubr.bf16.gmra.mxu0 %v634
  %v871 = vpop.f32.mrf.mxu0
  %v872 = vadd.f32 0.0, %v871
  %v873 = vpop.f32.mrf.mxu0
  %v874 = vpop.f32.mrf.mxu0
  %v875 = vadd.f32 0.0, %v874
  %v876 = vpop.f32.mrf.mxu0
  %877 = vdwg.mxu0
  %878 = vmatprep.subr.bf16.mxu0 0
  %879 = vmatpush1.bf16.msra.mxu0 %v804
  %880 = vmatprep.subr.bf16.mxu0 0
  %881 = vmatpush1.bf16.msra.mxu0 %v803
  %882 = vmatprep.subr.bf16.mxu0 0
  %883 = vmatpush1.bf16.msra.mxu0 %v802
  %884 = vmatprep.subr.bf16.mxu0 0
  %885 = vmatpush1.bf16.msra.mxu0 %v801
  %886 = vmatprep.subr.bf16.mxu0 0
  %887 = vmatpush1.bf16.msra.mxu0 %v800
  %888 = vmatprep.subr.bf16.mxu0 0
  %889 = vmatpush1.bf16.msra.mxu0 %v799
  %890 = vmatprep.subr.bf16.mxu0 0
  %891 = vmatpush1.bf16.msra.mxu0 %v798
  %892 = vmatprep.subr.bf16.mxu0 0
  %893 = vmatpush1.bf16.msra.mxu0 %v797
  %894 = vmatprep.subr.bf16.mxu0 0
  %895 = vmatpush2.bf16.msra.mxu0 0
  %896 = vmatprep.subr.bf16.mxu0 0
  %897 = vmatpush2.bf16.msra.mxu0 0
  %898 = vmatprep.subr.bf16.mxu0 0
  %899 = vmatpush2.bf16.msra.mxu0 0
  %900 = vmatprep.subr.bf16.mxu0 0
  %901 = vmatpush2.bf16.msra.mxu0 0
  %902 = vmatprep.subr.bf16.mxu0 0
  %903 = vmatpush2.bf16.msra.mxu0 0
  %904 = vmatprep.subr.bf16.mxu0 0
  %905 = vmatpush2.bf16.msra.mxu0 0
  %906 = vmatprep.subr.bf16.mxu0 0
  %907 = vmatpush2.bf16.msra.mxu0 0
  %908 = vmatprep.subr.bf16.mxu0 0
  %909 = vmatpush2.bf16.msra.mxu0 0
  %910 = vmatprep.mubr.bf16.mxu0 0
  %911 = vmatmul.mubr.bf16.gmra.mxu0 %v633
  %v912 = vpop.f32.mrf.mxu0
  %v913 = vadd.f32 %v864, %v912
  %v914 = vpop.f32.mrf.mxu0
  %v915 = vpop.f32.mrf.mxu0
  %v916 = vadd.f32 %v867, %v915
  %v917 = vpop.f32.mrf.mxu0
  %918 = vmatprep.mubr.bf16.mxu0 0
  %919 = vmatmul.mubr.bf16.gmra.mxu0 %v636
  %v920 = vpop.f32.mrf.mxu0
  %v921 = vadd.f32 %v872, %v920
  %v922 = vpop.f32.mrf.mxu0
  %v923 = vpop.f32.mrf.mxu0
  %v924 = vadd.f32 %v875, %v923
  %v925 = vpop.f32.mrf.mxu0
  %926 = vdwg.mxu0
  %v927 = vld [vmem:[%s4 + $0x2] sm:$0x1]
  %v928 = vld [vmem:[%s4 + $0x3] sm:$0x1]
  %v929 = vadd.f32 %v913, %v916
  %v930 = vadd.f32 %v929, %v921
  %v931 = vadd.f32 %v930, %v924
  %v932 = vrot.slane %v931, 4
  %v933 = vadd.f32 %v931, %v932
  %v934 = vrot.slane %v933, 2
  %v935 = vadd.f32 %v933, %v934
  %v936 = vrot.slane %v935, 1
  %v937 = vadd.f32 %v935, %v936
  %v938 = vmul.f32 %v913, %v913
  %v939 = vmul.f32 %v916, %v916
  %v940 = vmul.f32 %v921, %v921
  %v941 = vmul.f32 %v924, %v924
  %v942 = vadd.f32 %v938, %v939
  %v943 = vadd.f32 %v942, %v940
  %v944 = vadd.f32 %v943, %v941
  %v945 = vrot.slane %v944, 4
  %v946 = vadd.f32 %v944, %v945
  %v947 = vrot.slane %v946, 2
  %v948 = vadd.f32 %v946, %v947
  %v949 = vrot.slane %v948, 1
  %v950 = vadd.f32 %v948, %v949
  %v951 = vld [vmem:[%s5] sm:$0xff]
  %v952 = vld [vmem:[%s5 + $0x8] sm:$0xff]
  %v953 = vld [vmem:[%s5 + $0x10] sm:$0xff]
  %v954 = vld [vmem:[%s5 + $0x18] sm:$0xff]
  %v955 = vld [vmem:[%s5 + $0x20] sm:$0xff]
  %v956 = vld [vmem:[%s5 + $0x28] sm:$0xff]
  %v957 = vld [vmem:[%s5 + $0x30] sm:$0xff]
  %v958 = vld [vmem:[%s5 + $0x38] sm:$0xff]
  %v959 = vld [vmem:[%s5 + $0x40] sm:$0xff]
  %v960 = vld [vmem:[%s5 + $0x48] sm:$0xff]
  %v961 = vld [vmem:[%s5 + $0x50] sm:$0xff]
  %v962 = vld [vmem:[%s5 + $0x58] sm:$0xff]
  %v963 = vld [vmem:[%s5 + $0x60] sm:$0xff]
  %v964 = vld [vmem:[%s5 + $0x68] sm:$0xff]
  %v965 = vld [vmem:[%s5 + $0x70] sm:$0xff]
  %v966 = vld [vmem:[%s5 + $0x78] sm:$0xff]
  %967 = vmatprep.subr.mxu0 0.0
  %968 = vmatpush1.msra.mxu0 %v966
  %969 = vmatprep.subr.mxu0 0.0
  %970 = vmatpush1.msra.mxu0 %v965
  %971 = vmatprep.subr.mxu0 0.0
  %972 = vmatpush1.msra.mxu0 %v964
  %973 = vmatprep.subr.mxu0 0.0
  %974 = vmatpush1.msra.mxu0 %v963
  %975 = vmatprep.subr.mxu0 0.0
  %976 = vmatpush1.msra.mxu0 %v962
  %977 = vmatprep.subr.mxu0 0.0
  %978 = vmatpush1.msra.mxu0 %v961
  %979 = vmatprep.subr.mxu0 0.0
  %980 = vmatpush1.msra.mxu0 %v960
  %981 = vmatprep.subr.mxu0 0.0
  %982 = vmatpush1.msra.mxu0 %v959
  %983 = vmatprep.subr.mxu0 0.0
  %984 = vmatpush1.msra.mxu0 %v958
  %985 = vmatprep.subr.mxu0 0.0
  %986 = vmatpush1.msra.mxu0 %v957
  %987 = vmatprep.subr.mxu0 0.0
  %988 = vmatpush1.msra.mxu0 %v956
  %989 = vmatprep.subr.mxu0 0.0
  %990 = vmatpush1.msra.mxu0 %v955
  %991 = vmatprep.subr.mxu0 0.0
  %992 = vmatpush1.msra.mxu0 %v954
  %993 = vmatprep.subr.mxu0 0.0
  %994 = vmatpush1.msra.mxu0 %v953
  %995 = vmatprep.subr.mxu0 0.0
  %996 = vmatpush1.msra.mxu0 %v952
  %997 = vmatprep.subr.mxu0 0.0
  %998 = vmatpush1.msra.mxu0 %v951
  %999 = vmatprep.subr.mxu0 0.0
  %1000 = vmatpush2.msra.mxu0 0.0
  %1001 = vmatprep.subr.mxu0 0.0
  %1002 = vmatpush2.msra.mxu0 0.0
  %1003 = vmatprep.subr.mxu0 0.0
  %1004 = vmatpush2.msra.mxu0 0.0
  %1005 = vmatprep.subr.mxu0 0.0
  %1006 = vmatpush2.msra.mxu0 0.0
  %1007 = vmatprep.subr.mxu0 0.0
  %1008 = vmatpush2.msra.mxu0 0.0
  %1009 = vmatprep.subr.mxu0 0.0
  %1010 = vmatpush2.msra.mxu0 0.0
  %1011 = vmatprep.subr.mxu0 0.0
  %1012 = vmatpush2.msra.mxu0 0.0
  %1013 = vmatprep.subr.mxu0 0.0
  %1014 = vmatpush2.msra.mxu0 0.0
  %1015 = vmatprep.subr.mxu0 0.0
  %1016 = vmatpush2.msra.mxu0 0.0
  %1017 = vmatprep.subr.mxu0 0.0
  %1018 = vmatpush2.msra.mxu0 0.0
  %1019 = vmatprep.subr.mxu0 0.0
  %1020 = vmatpush2.msra.mxu0 0.0
  %1021 = vmatprep.subr.mxu0 0.0
  %1022 = vmatpush2.msra.mxu0 0.0
  %1023 = vmatprep.subr.mxu0 0.0
  %1024 = vmatpush2.msra.mxu0 0.0
  %1025 = vmatprep.subr.mxu0 0.0
  %1026 = vmatpush2.msra.mxu0 0.0
  %1027 = vmatprep.subr.mxu0 0.0
  %1028 = vmatpush2.msra.mxu0 0.0
  %1029 = vmatprep.subr.mxu0 0.0
  %1030 = vmatpush2.msra.mxu0 0.0
  %1031 = vmatprep.mubr.f32.mxu0 0.0
  %1032 = vmatmul.mubr.f32.gmra.mxu0 %v937
  %v1033 = vpop.f32.mrf.mxu0
  %v1034 = vadd.f32 0.0, %v1033
  %v1035 = vpop.f32.mrf.mxu0
  %1036 = vdwg.mxu0
  %1037 = vmatprep.subr.mxu0 0.0
  %1038 = vmatpush1.msra.mxu0 %v966
  %1039 = vmatprep.subr.mxu0 0.0
  %1040 = vmatpush1.msra.mxu0 %v965
  %1041 = vmatprep.subr.mxu0 0.0
  %1042 = vmatpush1.msra.mxu0 %v964
  %1043 = vmatprep.subr.mxu0 0.0
  %1044 = vmatpush1.msra.mxu0 %v963
  %1045 = vmatprep.subr.mxu0 0.0
  %1046 = vmatpush1.msra.mxu0 %v962
  %1047 = vmatprep.subr.mxu0 0.0
  %1048 = vmatpush1.msra.mxu0 %v961
  %1049 = vmatprep.subr.mxu0 0.0
  %1050 = vmatpush1.msra.mxu0 %v960
  %1051 = vmatprep.subr.mxu0 0.0
  %1052 = vmatpush1.msra.mxu0 %v959
  %1053 = vmatprep.subr.mxu0 0.0
  %1054 = vmatpush1.msra.mxu0 %v958
  %1055 = vmatprep.subr.mxu0 0.0
  %1056 = vmatpush1.msra.mxu0 %v957
  %1057 = vmatprep.subr.mxu0 0.0
  %1058 = vmatpush1.msra.mxu0 %v956
  %1059 = vmatprep.subr.mxu0 0.0
  %1060 = vmatpush1.msra.mxu0 %v955
  %1061 = vmatprep.subr.mxu0 0.0
  %1062 = vmatpush1.msra.mxu0 %v954
  %1063 = vmatprep.subr.mxu0 0.0
  %1064 = vmatpush1.msra.mxu0 %v953
  %1065 = vmatprep.subr.mxu0 0.0
  %1066 = vmatpush1.msra.mxu0 %v952
  %1067 = vmatprep.subr.mxu0 0.0
  %1068 = vmatpush1.msra.mxu0 %v951
  %1069 = vmatprep.subr.mxu0 0.0
  %1070 = vmatpush2.msra.mxu0 0.0
  %1071 = vmatprep.subr.mxu0 0.0
  %1072 = vmatpush2.msra.mxu0 0.0
  %1073 = vmatprep.subr.mxu0 0.0
  %1074 = vmatpush2.msra.mxu0 0.0
  %1075 = vmatprep.subr.mxu0 0.0
  %1076 = vmatpush2.msra.mxu0 0.0
  %1077 = vmatprep.subr.mxu0 0.0
  %1078 = vmatpush2.msra.mxu0 0.0
  %1079 = vmatprep.subr.mxu0 0.0
  %1080 = vmatpush2.msra.mxu0 0.0
  %1081 = vmatprep.subr.mxu0 0.0
  %1082 = vmatpush2.msra.mxu0 0.0
  %1083 = vmatprep.subr.mxu0 0.0
  %1084 = vmatpush2.msra.mxu0 0.0
  %1085 = vmatprep.subr.mxu0 0.0
  %1086 = vmatpush2.msra.mxu0 0.0
  %1087 = vmatprep.subr.mxu0 0.0
  %1088 = vmatpush2.msra.mxu0 0.0
  %1089 = vmatprep.subr.mxu0 0.0
  %1090 = vmatpush2.msra.mxu0 0.0
  %1091 = vmatprep.subr.mxu0 0.0
  %1092 = vmatpush2.msra.mxu0 0.0
  %1093 = vmatprep.subr.mxu0 0.0
  %1094 = vmatpush2.msra.mxu0 0.0
  %1095 = vmatprep.subr.mxu0 0.0
  %1096 = vmatpush2.msra.mxu0 0.0
  %1097 = vmatprep.subr.mxu0 0.0
  %1098 = vmatpush2.msra.mxu0 0.0
  %1099 = vmatprep.subr.mxu0 0.0
  %1100 = vmatpush2.msra.mxu0 0.0
  %1101 = vmatprep.mubr.f32.mxu0 0.0
  %1102 = vmatmul.mubr.f32.gmra.mxu0 %v950
  %v1103 = vpop.f32.mrf.mxu0
  %v1104 = vadd.f32 0.0, %v1103
  %v1105 = vpop.f32.mrf.mxu0
  %1106 = vdwg.mxu0
  %v1107 = vmul.f32 %v1034, %v1034
  %v1108 = vsub.f32 %v1104, %v1107
  %v1109 = vadd.f32 %v1108, 1e-05
  %v1110 = vrsqrt.pop %v1109
  %v1111 = vmul.f32 %v1110, %v927
  %v1112 = vmul.f32 %v1034, %v1111
  %v1113 = vsub.f32 %v928, %v1112
  %v1114 = vlaneseq
  %v1115 = vshrl.u32 %v1114, 7
  %v1116 = vsub.s32 0, %v1115
  %v1117 = vrot.slane %v1111, %v1116
  %v1118 = vmul.f32 %v913, %v1117
  %v1119 = vmul.f32 %v916, %v1117
  %v1120 = vmul.f32 %v921, %v1117
  %v1121 = vmul.f32 %v924, %v1117
  %v1122 = vlaneseq
  %v1123 = vshrl.u32 %v1122, 7
  %v1124 = vsub.s32 0, %v1123
  %v1125 = vrot.slane %v1113, %v1124
  %v1126 = vadd.f32 %v1118, %v1125
  %v1127 = vadd.f32 %v1119, %v1125
  %v1128 = vadd.f32 %v1120, %v1125
  %v1129 = vadd.f32 %v1121, %v1125
  %v1130 = vld [vmem:[%s3] sm:$0xff]
  %v1131 = vld [vmem:[%s3 + $0x8] sm:$0xff]
  %v1132 = vld [vmem:[%s3 + $0x10] sm:$0xff]
  %v1133 = vld [vmem:[%s3 + $0x18] sm:$0xff]
  %v1134 = vadd.f32 %v1126, %v1130
  %v1135 = vadd.f32 %v1127, %v1131
  %v1136 = vadd.f32 %v1128, %v1132
  %v1137 = vadd.f32 %v1129, %v1133
  %1138 = vst [vmem:[%s6] sm:$0xff] %v1134
  %1139 = vst [vmem:[%s6 + $0x8] sm:$0xff] %v1135
  %1140 = vst [vmem:[%s6 + $0x10] sm:$0xff] %v1136
  %1141 = vst [vmem:[%s6 + $0x18] sm:$0xff] %v1137
  // Predicated region
  $region26: #{residual_block_forward.1} parent=0 // pred_check
    _
  $region27: #{residual_block_forward.1} parent=0 // pred_check_branch
    %1143 = sbr.rel (0) target = $region29
  $region28: #{residual_block_forward.1} parent=0 // pred_region
    _
  $region29: #{residual_block_forward.1} parent=0 // pred_fallthru
    _
  // Predicated region
  $region30: #{residual_block_forward.1} parent=0 // pred_check
    _
  $region31: #{residual_block_forward.1} parent=0 // pred_check_branch
    %1145 = sbr.rel (0) target = $region33
  $region32: #{residual_block_forward.1} parent=0 // pred_region
    _
  $region33: #{residual_block_forward.1} parent=0 // pred_fallthru
    _

</llo_original>
